<compile_context>
chip_gen: v6e
topology: v6e:2x2x1
jax: 0.10.0
libtpu: 0.0.40
codegen_flags: <defaults>
</compile_context>

<pallas_src>
import jax
import jax.numpy as jnp
from jax.experimental import pallas as pl
from jax.experimental.pallas import tpu as pltpu


def _merge_kernel(tl_ref, tr_ref, bl_ref, br_ref, o_ref):
    # Input blocks : (tile_bc, 1, tile_h, W)
    # Output block : (tile_bc, 2, tile_h, 2W)
    #   band 0 -> top half of the merged image, band 1 -> bottom half.
    # Assemble each full-width row in registers (lane concat on the XLU slot)
    # before storing, so the writeback is two 2W-wide stores instead of four
    # W-lane masked ones.
    o_ref[:, 0:1] = jnp.concatenate([tl_ref[...], tr_ref[...]], axis=-1)
    o_ref[:, 1:2] = jnp.concatenate([bl_ref[...], br_ref[...]], axis=-1)


def _round_up(x, m):
    return ((x + m - 1) // m) * m


def _sublane_multiple(itemsize):
    # Packed layouts: f32 -> 8, bf16/f16 -> 16, int8/fp8 -> 32 sublanes/tile.
    return {4: 8, 2: 16, 1: 32}.get(int(itemsize), 8)


def _pick_tiles(bc, h, w, itemsize, footprint_budget=32 << 20):
    """Pick (tile_bc, tile_h) from padded (lane/sublane-aware) VMEM footprints.

    The footprint counts the double-buffered VMEM blocks Pallas allocates:
    4 quadrant input blocks + 1 merged output block, with the last dim rounded
    up to 128 lanes and the row dim rounded up to the dtype sublane multiple.
    """
    sub = _sublane_multiple(itemsize)
    w_in_pad = _round_up(w, 128)
    w_out_pad = _round_up(2 * w, 128)

    def footprint(tile_bc, tile_h):
        th_pad = _round_up(tile_h, sub)
        in_blk = tile_bc * th_pad * w_in_pad * itemsize          # one quadrant
        out_blk = tile_bc * 2 * th_pad * w_out_pad * itemsize    # merged block
        return 2 * (4 * in_blk + out_blk)                        # double-buffered

    # tile_h must be a multiple of the sublane count or the full H.  Prefer the
    # full H (one contiguous output slab per step), else the largest legal
    # value that fits the budget, else the smallest legal tile.
    legal_h = [h] + list(range(sub, h, sub))
    fitting = [d for d in legal_h if footprint(1, d) <= footprint_budget]
    tile_h = max(fitting) if fitting else min(legal_h)

    per_bc = footprint(1, tile_h)
    tile_bc = int(max(1, min(bc, footprint_budget // per_bc)))

    # Keep >= 2 steps on a "parallel" grid axis so megacore (v7x) has work to
    # shard and adjacent-step input/output DMAs can overlap.
    if bc >= 2:
        tile_bc = min(tile_bc, -(-bc // 2))          # grid axis 0 >= 2 steps
    elif tile_h == h:
        halves = [d for d in range(sub, h, sub) if d <= max(sub, -(-h // 2))]
        if halves:
            tile_h = max(halves)                     # grid axis 1 >= 2 steps
    return tile_bc, tile_h


@jax.jit
def merge_four_images(top_left, top_right, bottom_left, bottom_right):
    B, C, H, W = top_left.shape
    for t in (top_right, bottom_left, bottom_right):
        assert t.shape == (B, C, H, W), "all four quadrants must share a shape"
    dtype = top_left.dtype
    BC = B * C
    itemsize = jnp.dtype(dtype).itemsize

    tile_bc, tile_h = _pick_tiles(BC, H, W, itemsize)
    grid = (pl.cdiv(BC, tile_bc), pl.cdiv(H, tile_h))

    # Free row-major views: quadrants -> (BC, 1, H, W); the kernel writes a
    # (BC, 2, H, 2W) tensor whose band axis folds into merged rows, so the
    # final reshape to (B, C, 2H, 2W) is also a free view.
    tl4 = top_left.reshape(BC, 1, H, W)
    tr4 = top_right.reshape(BC, 1, H, W)
    bl4 = bottom_left.reshape(BC, 1, H, W)
    br4 = bottom_right.reshape(BC, 1, H, W)

    in_spec = pl.BlockSpec((tile_bc, 1, tile_h, W), lambda i, j: (i, 0, j, 0))
    out_spec = pl.BlockSpec((tile_bc, 2, tile_h, 2 * W), lambda i, j: (i, 0, j, 0))

    out4 = pl.pallas_call(
        _merge_kernel,
        out_shape=jax.ShapeDtypeStruct((BC, 2, H, 2 * W), dtype),
        grid_spec=pltpu.PrefetchScalarGridSpec(
            num_scalar_prefetch=0,
            grid=grid,
            in_specs=[in_spec, in_spec, in_spec, in_spec],
            out_specs=out_spec,
        ),
        compiler_params=pltpu.CompilerParams(
            dimension_semantics=("parallel", "parallel"),
            vmem_limit_bytes=48 * 1024 * 1024,
        ),
    )(tl4, tr4, bl4, br4)

    return out4.reshape(B, C, 2 * H, 2 * W)


def _reference(tl, tr, bl, br):
    top = jnp.concatenate([tl, tr], axis=3)
    bottom = jnp.concatenate([bl, br], axis=3)
    return jnp.concatenate([top, bottom], axis=2)


if __name__ == "__main__":
    key = jax.random.PRNGKey(0)
    k1, k2, k3, k4 = jax.random.split(key, 4)

    B, C, H, W = 2, 4, 16, 16
    tl = jax.random.normal(k1, (B, C, H, W), dtype=jnp.float32)
    tr = jax.random.normal(k2, (B, C, H, W), dtype=jnp.float32)
    bl = jax.random.normal(k3, (B, C, H, W), dtype=jnp.float32)
    br = jax.random.normal(k4, (B, C, H, W), dtype=jnp.float32)

    out = merge_four_images(tl, tr, bl, br)
    out = jax.block_until_ready(out)

    ref = _reference(tl, tr, bl, br)
    assert out.shape == (B, C, 2 * H, 2 * W)
    assert jnp.array_equal(out, ref), "mismatch vs reference concat"

    print("KERNEL_OK")
</pallas_src>

<mosaic_0001>
module attributes {stable_mosaic.version = 11 : i64} {
  func.func @_merge_kernel(%arg0: i32, %arg1: i32, %arg2: memref<4x1x16x16xf32, #tpu.memory_space<vmem>>, %arg3: memref<4x1x16x16xf32, #tpu.memory_space<vmem>>, %arg4: memref<4x1x16x16xf32, #tpu.memory_space<vmem>>, %arg5: memref<4x1x16x16xf32, #tpu.memory_space<vmem>>, %arg6: memref<4x2x16x32xf32, #tpu.memory_space<vmem>>) attributes {dimension_semantics = [#tpu.dimension_semantics<parallel>, #tpu.dimension_semantics<parallel>], iteration_bounds = array<i64: 2, 1>, scalar_prefetch = 0 : i64, scratch_operands = 0 : i64, tpu.core_type = #tpu.core_type<tc>, window_params = [{transform_indices = @transform_0, window_bounds = array<i64: 4, 1, 16, 16>}, {transform_indices = @transform_1, window_bounds = array<i64: 4, 1, 16, 16>}, {transform_indices = @transform_2, window_bounds = array<i64: 4, 1, 16, 16>}, {transform_indices = @transform_3, window_bounds = array<i64: 4, 1, 16, 16>}, {transform_indices = @transform_4, window_bounds = array<i64: 4, 2, 16, 32>}]} {
    %c0 = arith.constant 0 : index
    %c0_0 = arith.constant 0 : index
    %c0_1 = arith.constant 0 : index
    %c0_2 = arith.constant 0 : index
    %0 = vector.load %arg2[%c0, %c0_0, %c0_1, %c0_2] : memref<4x1x16x16xf32, #tpu.memory_space<vmem>>, vector<4x1x16x16xf32>
    %c0_3 = arith.constant 0 : index
    %c0_4 = arith.constant 0 : index
    %c0_5 = arith.constant 0 : index
    %c0_6 = arith.constant 0 : index
    %1 = vector.load %arg3[%c0_3, %c0_4, %c0_5, %c0_6] : memref<4x1x16x16xf32, #tpu.memory_space<vmem>>, vector<4x1x16x16xf32>
    %2 = tpu.concatenate %0, %1 in 3 : vector<4x1x16x16xf32>, vector<4x1x16x16xf32> -> vector<4x1x16x32xf32>
    %c0_7 = arith.constant 0 : index
    %c0_8 = arith.constant 0 : index
    %c0_9 = arith.constant 0 : index
    %c0_10 = arith.constant 0 : index
    %3 = vector.load %arg6[%c0_7, %c0_8, %c0_9, %c0_10] : memref<4x2x16x32xf32, #tpu.memory_space<vmem>>, vector<4x1x16x32xf32>
    tpu.vector_store %arg6[%c0_7, %c0_8, %c0_9, %c0_10], %2 {strides = array<i32>} : memref<4x2x16x32xf32, #tpu.memory_space<vmem>>, vector<4x1x16x32xf32>,
    %c0_11 = arith.constant 0 : index
    %c0_12 = arith.constant 0 : index
    %c0_13 = arith.constant 0 : index
    %c0_14 = arith.constant 0 : index
    %4 = vector.load %arg4[%c0_11, %c0_12, %c0_13, %c0_14] : memref<4x1x16x16xf32, #tpu.memory_space<vmem>>, vector<4x1x16x16xf32>
    %c0_15 = arith.constant 0 : index
    %c0_16 = arith.constant 0 : index
    %c0_17 = arith.constant 0 : index
    %c0_18 = arith.constant 0 : index
    %5 = vector.load %arg5[%c0_15, %c0_16, %c0_17, %c0_18] : memref<4x1x16x16xf32, #tpu.memory_space<vmem>>, vector<4x1x16x16xf32>
    %6 = tpu.concatenate %4, %5 in 3 : vector<4x1x16x16xf32>, vector<4x1x16x16xf32> -> vector<4x1x16x32xf32>
    %c0_19 = arith.constant 0 : index
    %c1 = arith.constant 1 : index
    %c0_20 = arith.constant 0 : index
    %c0_21 = arith.constant 0 : index
    %7 = vector.load %arg6[%c0_19, %c1, %c0_20, %c0_21] : memref<4x2x16x32xf32, #tpu.memory_space<vmem>>, vector<4x1x16x32xf32>
    tpu.vector_store %arg6[%c0_19, %c1, %c0_20, %c0_21], %6 {strides = array<i32>} : memref<4x2x16x32xf32, #tpu.memory_space<vmem>>, vector<4x1x16x32xf32>,
    return
  }
  func.func @transform_0(%arg0: i32, %arg1: i32) -> (i32, i32, i32, i32) {
    %c0_i32 = arith.constant 0 : i32
    %c0_i32_0 = arith.constant 0 : i32
    %c0_i32_1 = arith.constant 0 : i32
    return %arg0, %c0_i32, %arg1, %c0_i32_0 : i32, i32, i32, i32
  }
  func.func @transform_1(%arg0: i32, %arg1: i32) -> (i32, i32, i32, i32) {
    %c0_i32 = arith.constant 0 : i32
    %c0_i32_0 = arith.constant 0 : i32
    %c0_i32_1 = arith.constant 0 : i32
    return %arg0, %c0_i32, %arg1, %c0_i32_0 : i32, i32, i32, i32
  }
  func.func @transform_2(%arg0: i32, %arg1: i32) -> (i32, i32, i32, i32) {
    %c0_i32 = arith.constant 0 : i32
    %c0_i32_0 = arith.constant 0 : i32
    %c0_i32_1 = arith.constant 0 : i32
    return %arg0, %c0_i32, %arg1, %c0_i32_0 : i32, i32, i32, i32
  }
  func.func @transform_3(%arg0: i32, %arg1: i32) -> (i32, i32, i32, i32) {
    %c0_i32 = arith.constant 0 : i32
    %c0_i32_0 = arith.constant 0 : i32
    %c0_i32_1 = arith.constant 0 : i32
    return %arg0, %c0_i32, %arg1, %c0_i32_0 : i32, i32, i32, i32
  }
  func.func @transform_4(%arg0: i32, %arg1: i32) -> (i32, i32, i32, i32) {
    %c0_i32 = arith.constant 0 : i32
    %c0_i32_0 = arith.constant 0 : i32
    %c0_i32_1 = arith.constant 0 : i32
    return %arg0, %c0_i32, %arg1, %c0_i32_0 : i32, i32, i32, i32
  }
}

</mosaic_0001>

<llo_original>
// kernel: merge_four_images.1
$region0: #{merge_four_images.1}
  #allocation0 [shape = 'u32[]', space=smem, size = 0x4, offset = 0x4, fixed_abs, tag = 'smem constant byte address 0x4 - core index']
  #allocation1 [shape = 'u32[144,128]{1,0:T(1,128)}', space=vmem, size = 0x12000, scoped, tag = 'internal scratch']
  %s0 = inlined_call_operand.hbm [shape: f32[8,1,16,16], index: 0, kind: input, shape index: {}]
  %s1 = inlined_call_operand.hbm [shape: f32[8,1,16,16], index: 1, kind: input, shape index: {}]
  %s2 = inlined_call_operand.hbm [shape: f32[8,1,16,16], index: 2, kind: input, shape index: {}]
  %s3 = inlined_call_operand.hbm [shape: f32[8,1,16,16], index: 3, kind: input, shape index: {}]
  %s4 = inlined_call_operand.hbm [shape: f32[8,2,16,32], index: 4, kind: output, shape index: {}]
  %s5 = sld [smem:[#allocation0]]
  $region65: #{merge_four_images.1} parent=0
    _
  %s7 = ssub.s32 1, %s5
  %s8 = scalar_select 0, %s7, %s5
  $region1: #{merge_four_images.1} parent=0
    #allocation2 [shape = 'u8[65536]{0}', space=vmem, size = 0x10000, scoped, tag = 'input window, operand 0']
    #allocation3 [shape = 's32[2]{0}', space=sflag, size = 0x8, scoped, tag = 'scoped memory for merge_four_images.1']
    #allocation4 [shape = 's32[2]{0}', space=sflag, size = 0x8, scoped, tag = 'scoped memory for merge_four_images.1']
    #allocation5 [shape = 'u8[65536]{0}', space=vmem, size = 0x10000, scoped, tag = 'input window, operand 1']
    #allocation6 [shape = 's32[2]{0}', space=sflag, size = 0x8, scoped, tag = 'scoped memory for merge_four_images.1']
    #allocation7 [shape = 'u8[65536]{0}', space=vmem, size = 0x10000, scoped, tag = 'input window, operand 2']
    #allocation8 [shape = 'u8[65536]{0}', space=vmem, size = 0x10000, scoped, tag = 'input window, operand 3']
    #allocation9 [shape = 's32[2]{0}', space=sflag, size = 0x8, scoped, tag = 'scoped memory for merge_four_images.1']
    #allocation10 [shape = 'u8[131072]{0}', space=vmem, size = 0x20000, scoped, tag = 'output window, operand 0']
    %9 = vsyncpa [#allocation3], 0
    %s10 = scalar_lea.sflag [#allocation3], 1
    %11 = vsyncpa %s10, 0
    %12 = vsyncpa [#allocation6], 0
    %s13 = scalar_lea.sflag [#allocation6], 1
    %14 = vsyncpa %s13, 0
    %15 = vsyncpa [#allocation9], 0
    %s16 = scalar_lea.sflag [#allocation9], 1
    %17 = vsyncpa %s16, 0
    %18 = vsyncpa [#allocation4], 0
    %s19 = scalar_lea.sflag [#allocation4], 1
    %20 = vsyncpa %s19, 0
    loop: start=0, step=1, limit=4
    $region2: #{merge_four_images.1} parent=1 // loop_pre_header
      _
    $region3: #{merge_four_images.1} parent=1 // loop_header
      %s22 = sphi 0, %s26
      %p23 = scmp.ge.s32.totalorder %s22, 4
      %s29 = sphi 0, %s41
      %s30 = sphi 0, %s37
      %s31 = sphi 0, %s29
      %s32 = sphi 0, %s30
      %s33 = sphi 0, %s31
      %s34 = sphi 0, %s32
      %s46 = sphi 0, %s48
      %s49 = sphi 0, %s46
      %s50 = sphi 0, %s49
      %s66 = sphi 0, %s50
      %s74 = sphi 0, %s76
      %s77 = sphi 0, %s74
      %s78 = sphi 0, %s77
      %s94 = sphi 0, %s78
      %s102 = sphi 0, %s104
      %s105 = sphi 0, %s102
      %s106 = sphi 0, %s105
      %s122 = sphi 0, %s106
      %s130 = sphi 0, %s132
      %s133 = sphi 0, %s130
      %s134 = sphi 0, %s133
      %s150 = sphi 0, %s134
      %s158 = sphi 0, %s160
      %s161 = sphi 0, %s158
      %s162 = sphi 0, %s161
      %s178 = sphi 0, %s162
    $region4: #{merge_four_images.1} parent=1 // loop_header_branch
      %25 = sbr.rel (%p23) target = $region8
    $region5: #{merge_four_images.1} parent=1 // loop_body
      %s27 = ssub.s32 %s22, 1
      %s28 = ssub.s32 %s22, 2
      %s35 = sadd.s32 1, %s30
      %p36 = scmp.ge.s32.totalorder %s35, 1
      %s37 = scalar_select %p36, 0, %s35
      %s38 = sadd.s32 1, %s29
      %s39 = scalar_select %p36, %s38, %s29
      %p40 = scmp.ge.s32.totalorder %s39, 2
      %s41 = scalar_select %p40, 0, %s39
      %s42 = ssub.s32 %s29, %s41
      %s43 = ssub.s32 %s30, %s37
      %s44 = sor.u32 %s42, %s43
      %p45 = scmp.eq.s32.totalorder %s44, 0
      %s47 = sadd.s32 %s46, 1
      %s48 = scalar_select %p45, %s46, %s47
      %p51 = pneg %p45
      %p52 = scmp.eq.s32.totalorder %s22, 1
      %p53 = por %p51, %p52
      %p54 = scmp.ne.s32.totalorder %s46, %s49
      %p55 = scmp.eq.s32.totalorder %s22, 0
      %p56 = por %p54, %p55
      %p57 = scmp.ne.s32.totalorder %s46, %s49
      %p58 = scmp.eq.s32.totalorder %s27, 1
      %p59 = por %p57, %p58
      %p60 = scmp.ne.s32.totalorder %s49, %s50
      %p61 = scmp.eq.s32.totalorder %s27, 0
      %p62 = por %p60, %p61
      %p63 = scmp.ne.s32.totalorder %s49, %s50
      %p64 = scmp.eq.s32.totalorder %s28, 1
      %p65 = por %p63, %p64
      %p67 = scmp.ne.s32.totalorder %s50, %s66
      %p68 = scmp.eq.s32.totalorder %s28, 0
      %p69 = por %p67, %p68
      %s70 = ssub.s32 %s29, %s41
      %s71 = ssub.s32 %s30, %s37
      %s72 = sor.u32 %s70, %s71
      %p73 = scmp.eq.s32.totalorder %s72, 0
      %s75 = sadd.s32 %s74, 1
      %s76 = scalar_select %p73, %s74, %s75
      %p79 = pneg %p73
      %p80 = scmp.eq.s32.totalorder %s22, 1
      %p81 = por %p79, %p80
      %p82 = scmp.ne.s32.totalorder %s74, %s77
      %p83 = scmp.eq.s32.totalorder %s22, 0
      %p84 = por %p82, %p83
      %p85 = scmp.ne.s32.totalorder %s74, %s77
      %p86 = scmp.eq.s32.totalorder %s27, 1
      %p87 = por %p85, %p86
      %p88 = scmp.ne.s32.totalorder %s77, %s78
      %p89 = scmp.eq.s32.totalorder %s27, 0
      %p90 = por %p88, %p89
      %p91 = scmp.ne.s32.totalorder %s77, %s78
      %p92 = scmp.eq.s32.totalorder %s28, 1
      %p93 = por %p91, %p92
      %p95 = scmp.ne.s32.totalorder %s78, %s94
      %p96 = scmp.eq.s32.totalorder %s28, 0
      %p97 = por %p95, %p96
      %s98 = ssub.s32 %s29, %s41
      %s99 = ssub.s32 %s30, %s37
      %s100 = sor.u32 %s98, %s99
      %p101 = scmp.eq.s32.totalorder %s100, 0
      %s103 = sadd.s32 %s102, 1
      %s104 = scalar_select %p101, %s102, %s103
      %p107 = pneg %p101
      %p108 = scmp.eq.s32.totalorder %s22, 1
      %p109 = por %p107, %p108
      %p110 = scmp.ne.s32.totalorder %s102, %s105
      %p111 = scmp.eq.s32.totalorder %s22, 0
      %p112 = por %p110, %p111
      %p113 = scmp.ne.s32.totalorder %s102, %s105
      %p114 = scmp.eq.s32.totalorder %s27, 1
      %p115 = por %p113, %p114
      %p116 = scmp.ne.s32.totalorder %s105, %s106
      %p117 = scmp.eq.s32.totalorder %s27, 0
      %p118 = por %p116, %p117
      %p119 = scmp.ne.s32.totalorder %s105, %s106
      %p120 = scmp.eq.s32.totalorder %s28, 1
      %p121 = por %p119, %p120
      %p123 = scmp.ne.s32.totalorder %s106, %s122
      %p124 = scmp.eq.s32.totalorder %s28, 0
      %p125 = por %p123, %p124
      %s126 = ssub.s32 %s29, %s41
      %s127 = ssub.s32 %s30, %s37
      %s128 = sor.u32 %s126, %s127
      %p129 = scmp.eq.s32.totalorder %s128, 0
      %s131 = sadd.s32 %s130, 1
      %s132 = scalar_select %p129, %s130, %s131
      %p135 = pneg %p129
      %p136 = scmp.eq.s32.totalorder %s22, 1
      %p137 = por %p135, %p136
      %p138 = scmp.ne.s32.totalorder %s130, %s133
      %p139 = scmp.eq.s32.totalorder %s22, 0
      %p140 = por %p138, %p139
      %p141 = scmp.ne.s32.totalorder %s130, %s133
      %p142 = scmp.eq.s32.totalorder %s27, 1
      %p143 = por %p141, %p142
      %p144 = scmp.ne.s32.totalorder %s133, %s134
      %p145 = scmp.eq.s32.totalorder %s27, 0
      %p146 = por %p144, %p145
      %p147 = scmp.ne.s32.totalorder %s133, %s134
      %p148 = scmp.eq.s32.totalorder %s28, 1
      %p149 = por %p147, %p148
      %p151 = scmp.ne.s32.totalorder %s134, %s150
      %p152 = scmp.eq.s32.totalorder %s28, 0
      %p153 = por %p151, %p152
      %s154 = ssub.s32 %s29, %s41
      %s155 = ssub.s32 %s30, %s37
      %s156 = sor.u32 %s154, %s155
      %p157 = scmp.eq.s32.totalorder %s156, 0
      %s159 = sadd.s32 %s158, 1
      %s160 = scalar_select %p157, %s158, %s159
      %p163 = pneg %p157
      %p164 = scmp.eq.s32.totalorder %s22, 1
      %p165 = por %p163, %p164
      %p166 = scmp.ne.s32.totalorder %s158, %s161
      %p167 = scmp.eq.s32.totalorder %s22, 0
      %p168 = por %p166, %p167
      %p169 = scmp.ne.s32.totalorder %s158, %s161
      %p170 = scmp.eq.s32.totalorder %s27, 1
      %p171 = por %p169, %p170
      %p172 = scmp.ne.s32.totalorder %s161, %s162
      %p173 = scmp.eq.s32.totalorder %s27, 0
      %p174 = por %p172, %p173
      %p175 = scmp.ne.s32.totalorder %s161, %s162
      %p176 = scmp.eq.s32.totalorder %s28, 1
      %p177 = por %p175, %p176
      %p179 = scmp.ne.s32.totalorder %s162, %s178
      %p180 = scmp.eq.s32.totalorder %s28, 0
      %p181 = por %p179, %p180
      %p182 = scmp.le.s32.totalorder 1, %s22
      %p183 = scmp.lt.s32.totalorder %s22, 3
      %p184 = pnand %p182, %p183
      %p185 = pneg %p184
      // Predicated region
      $region9: #{merge_four_images.1} parent=5 // pred_check
        _
      $region10: #{merge_four_images.1} parent=5 // pred_check_branch
        %187 = sbr.rel (%p184) target = $region12
      $region11: #{merge_four_images.1} parent=5 // pred_region
        %s188 = ssub.s32 %s22, 1
      $region12: #{merge_four_images.1} parent=5 // pred_fallthru
        _
      %p189 = scmp.lt.s32.totalorder %s22, 2
      // Predicated region
      $region13: #{merge_four_images.1} parent=5 // pred_check
        %p190 = pneg %p189
      $region14: #{merge_four_images.1} parent=5 // pred_check_branch
        %192 = sbr.rel (%p190) target = $region16
      $region15: #{merge_four_images.1} parent=5 // pred_region
        // Predicated region
        $region17: #{merge_four_images.1} parent=15 // pred_check
          %p193 = pneg %p56
        $region18: #{merge_four_images.1} parent=15 // pred_check_branch
          %195 = sbr.rel (%p193) target = $region20
        $region19: #{merge_four_images.1} parent=15 // pred_region
          %s196 = sand.u32 %s46, 1
          %s197 = scalar_lea.sflag [#allocation3], %s196
          %s198 = sand.u32 %s46, 1
          %s199 = smul.addr %s198, 64
          %s200 = scalar_lea.vmem [#allocation2], %s199
          %s201 = smul.u32 4, %s29
          %s202 = smul.u32 2, %s30
          %s204 = ssub.s32 1024, 1024
          %205 = vsyncadd %s197, %s204
          %s206 = smul.addr %s201, 2
          %s207 = sadd.s32 %s202, %s206
          %s208 = smul.addr %s207, 128
          %s209 = scalar_lea.hbm %s0, %s208
          %s210 = sshll.u32 %s200, 4
          %s211 = int_to_ptr.vmem [resolvable:$true] %s210
          %216 = dma.hbm_to_vmem [thread:$0]  %s209, 1024, %s211, %s197, 128, 128, 8
        $region20: #{merge_four_images.1} parent=15 // pred_fallthru
          _
        // Predicated region
        $region21: #{merge_four_images.1} parent=15 // pred_check
          %p217 = pneg %p84
        $region22: #{merge_four_images.1} parent=15 // pred_check_branch
          %219 = sbr.rel (%p217) target = $region24
        $region23: #{merge_four_images.1} parent=15 // pred_region
          %s220 = sand.u32 %s22, 1
          %s221 = scalar_lea.sflag [#allocation6], %s220
          %s222 = sand.u32 %s74, 1
          %s223 = smul.addr %s222, 64
          %s224 = scalar_lea.vmem [#allocation5], %s223
          %s225 = smul.u32 4, %s29
          %s226 = smul.u32 2, %s30
          %s228 = ssub.s32 1024, 1024
          %229 = vsyncadd %s221, %s228
          %s230 = smul.addr %s225, 2
          %s231 = sadd.s32 %s226, %s230
          %s232 = smul.addr %s231, 128
          %s233 = scalar_lea.hbm %s1, %s232
          %s234 = sshll.u32 %s224, 4
          %s235 = int_to_ptr.vmem [resolvable:$true] %s234
          %240 = dma.hbm_to_vmem [thread:$0]  %s233, 1024, %s235, %s221, 128, 128, 8
        $region24: #{merge_four_images.1} parent=15 // pred_fallthru
          _
        // Predicated region
        $region25: #{merge_four_images.1} parent=15 // pred_check
          %p241 = pneg %p112
        $region26: #{merge_four_images.1} parent=15 // pred_check_branch
          %243 = sbr.rel (%p241) target = $region28
        $region27: #{merge_four_images.1} parent=15 // pred_region
          %s244 = sand.u32 %s22, 1
          %s245 = scalar_lea.sflag [#allocation6], %s244
          %s246 = sand.u32 %s102, 1
          %s247 = smul.addr %s246, 64
          %s248 = scalar_lea.vmem [#allocation7], %s247
          %s249 = smul.u32 4, %s29
          %s250 = smul.u32 2, %s30
          %s252 = ssub.s32 1024, 1024
          %253 = vsyncadd %s245, %s252
          %s254 = smul.addr %s249, 2
          %s255 = sadd.s32 %s250, %s254
          %s256 = smul.addr %s255, 128
          %s257 = scalar_lea.hbm %s2, %s256
          %s258 = sshll.u32 %s248, 4
          %s259 = int_to_ptr.vmem [resolvable:$true] %s258
          %264 = dma.hbm_to_vmem [thread:$0]  %s257, 1024, %s259, %s245, 128, 128, 8
        $region28: #{merge_four_images.1} parent=15 // pred_fallthru
          _
        // Predicated region
        $region29: #{merge_four_images.1} parent=15 // pred_check
          %p265 = pneg %p140
        $region30: #{merge_four_images.1} parent=15 // pred_check_branch
          %267 = sbr.rel (%p265) target = $region32
        $region31: #{merge_four_images.1} parent=15 // pred_region
          %s268 = sand.u32 %s130, 1
          %s269 = scalar_lea.sflag [#allocation9], %s268
          %s270 = sand.u32 %s130, 1
          %s271 = smul.addr %s270, 64
          %s272 = scalar_lea.vmem [#allocation8], %s271
          %s273 = smul.u32 4, %s29
          %s274 = smul.u32 2, %s30
          %s276 = ssub.s32 1024, 1024
          %277 = vsyncadd %s269, %s276
          %s278 = smul.addr %s273, 2
          %s279 = sadd.s32 %s274, %s278
          %s280 = smul.addr %s279, 128
          %s281 = scalar_lea.hbm %s3, %s280
          %s282 = sshll.u32 %s272, 4
          %s283 = int_to_ptr.vmem [resolvable:$true] %s282
          %288 = dma.hbm_to_vmem [thread:$0]  %s281, 1024, %s283, %s269, 128, 128, 8
        $region32: #{merge_four_images.1} parent=15 // pred_fallthru
          _
      $region16: #{merge_four_images.1} parent=5 // pred_fallthru
        _
      %p289 = scmp.le.s32.totalorder 1, %s22
      %p290 = scmp.lt.s32.totalorder %s22, 3
      %p291 = pnand %p289, %p290
      %p292 = pneg %p291
      // Predicated region
      $region33: #{merge_four_images.1} parent=5 // pred_check
        _
      $region34: #{merge_four_images.1} parent=5 // pred_check_branch
        %294 = sbr.rel (%p291) target = $region36
      $region35: #{merge_four_images.1} parent=5 // pred_region
        %s295 = ssub.s32 %s22, 1
        %s296 = sand.u32 %s49, 1
        %s297 = scalar_lea.sflag [#allocation3], %s296
        %s298 = sand.u32 %s49, 1
        %s299 = smul.addr %s298, 64
        %s300 = scalar_lea.vmem [#allocation2], %s299
        // Predicated region
        $region37: #{merge_four_images.1} parent=35 // pred_check
          %p301 = pneg %p62
        $region38: #{merge_four_images.1} parent=35 // pred_check_branch
          %303 = sbr.rel (%p301) target = $region40
        $region39: #{merge_four_images.1} parent=35 // pred_region
          %304 = dma.done %s297, 1024
        $region40: #{merge_four_images.1} parent=35 // pred_fallthru
          _
        %s305 = sand.u32 %s27, 1
        %s306 = scalar_lea.sflag [#allocation6], %s305
        %s307 = sand.u32 %s77, 1
        %s308 = smul.addr %s307, 64
        %s309 = scalar_lea.vmem [#allocation5], %s308
        // Predicated region
        $region41: #{merge_four_images.1} parent=35 // pred_check
          %p310 = pneg %p90
        $region42: #{merge_four_images.1} parent=35 // pred_check_branch
          %312 = sbr.rel (%p310) target = $region44
        $region43: #{merge_four_images.1} parent=35 // pred_region
          %313 = dma.done %s306, 1024
        $region44: #{merge_four_images.1} parent=35 // pred_fallthru
          _
        %s314 = sand.u32 %s27, 1
        %s315 = scalar_lea.sflag [#allocation6], %s314
        %s316 = sand.u32 %s105, 1
        %s317 = smul.addr %s316, 64
        %s318 = scalar_lea.vmem [#allocation7], %s317
        // Predicated region
        $region45: #{merge_four_images.1} parent=35 // pred_check
          %p319 = pneg %p118
        $region46: #{merge_four_images.1} parent=35 // pred_check_branch
          %321 = sbr.rel (%p319) target = $region48
        $region47: #{merge_four_images.1} parent=35 // pred_region
          %322 = dma.done %s315, 1024
        $region48: #{merge_four_images.1} parent=35 // pred_fallthru
          _
        %s323 = sand.u32 %s133, 1
        %s324 = scalar_lea.sflag [#allocation9], %s323
        %s325 = sand.u32 %s133, 1
        %s326 = smul.addr %s325, 64
        %s327 = scalar_lea.vmem [#allocation8], %s326
        // Predicated region
        $region49: #{merge_four_images.1} parent=35 // pred_check
          %p328 = pneg %p146
        $region50: #{merge_four_images.1} parent=35 // pred_check_branch
          %330 = sbr.rel (%p328) target = $region52
        $region51: #{merge_four_images.1} parent=35 // pred_region
          %331 = dma.done %s324, 1024
        $region52: #{merge_four_images.1} parent=35 // pred_fallthru
          _
        %s332 = sand.u32 %s49, 1
        %s333 = scalar_lea.sflag [#allocation3], %s332
        %s334 = sand.u32 %s49, 1
        %s335 = smul.addr %s334, 64
        %s336 = scalar_lea.vmem [#allocation2], %s335
        %p337 = pneg %p62
        %p338 = pneg %p59
        %s339 = sand.u32 %s27, 1
        %s340 = scalar_lea.sflag [#allocation6], %s339
        %s341 = sand.u32 %s77, 1
        %s342 = smul.addr %s341, 64
        %s343 = scalar_lea.vmem [#allocation5], %s342
        %p344 = pneg %p90
        %p345 = pneg %p87
        %s346 = sand.u32 %s27, 1
        %s347 = scalar_lea.sflag [#allocation6], %s346
        %s348 = sand.u32 %s105, 1
        %s349 = smul.addr %s348, 64
        %s350 = scalar_lea.vmem [#allocation7], %s349
        %p351 = pneg %p118
        %p352 = pneg %p115
        %s353 = sand.u32 %s133, 1
        %s354 = scalar_lea.sflag [#allocation9], %s353
        %s355 = sand.u32 %s133, 1
        %s356 = smul.addr %s355, 64
        %s357 = scalar_lea.vmem [#allocation8], %s356
        %p358 = pneg %p146
        %p359 = pneg %p143
        %p360 = pneg %p174
        %p361 = pneg %p171
        %s362 = sand.u32 %s161, 1
        %s363 = scalar_lea.sflag [#allocation4], %s362
        %s364 = sand.u32 %s161, 1
        %s365 = smul.addr %s364, 128
        %s366 = scalar_lea.vmem [#allocation10], %s365
        %s367 = smul.u32 4, %s31
        %s368 = smul.u32 2, %s32
        %s369 = smul.u32 4, %s31
        %s370 = smul.u32 2, %s32
        %s371 = smul.u32 4, %s31
        %s372 = smul.u32 2, %s32
        %s373 = smul.u32 4, %s31
        %s374 = smul.u32 2, %s32
        %s375 = smul.u32 4, %s31
        %s376 = smul.u32 2, %s32
        %v377 = vld [vmem:[%s300] sm:$0xff]
        %v378 = vld [vmem:[%s300 + $0x8] sm:$0xff]
        %v379 = vld [vmem:[%s300 + $0x10] sm:$0xff]
        %v380 = vld [vmem:[%s300 + $0x18] sm:$0xff]
        %v381 = vld [vmem:[%s300 + $0x20] sm:$0xff]
        %v382 = vld [vmem:[%s300 + $0x28] sm:$0xff]
        %v383 = vld [vmem:[%s300 + $0x30] sm:$0xff]
        %v384 = vld [vmem:[%s300 + $0x38] sm:$0xff]
        %v385 = vld [vmem:[%s309] sm:$0xff]
        %v386 = vld [vmem:[%s309 + $0x8] sm:$0xff]
        %v387 = vld [vmem:[%s309 + $0x10] sm:$0xff]
        %v388 = vld [vmem:[%s309 + $0x18] sm:$0xff]
        %v389 = vld [vmem:[%s309 + $0x20] sm:$0xff]
        %v390 = vld [vmem:[%s309 + $0x28] sm:$0xff]
        %v391 = vld [vmem:[%s309 + $0x30] sm:$0xff]
        %v392 = vld [vmem:[%s309 + $0x38] sm:$0xff]
        %401 = vrot.lane.b32.xlu0 %v385, 16
        %v402 = vpop.permute.xlu0 %401
        %403 = vrot.lane.b32.xlu0 %v386, 16
        %v404 = vpop.permute.xlu0 %403
        %405 = vrot.lane.b32.xlu0 %v387, 16
        %v406 = vpop.permute.xlu0 %405
        %407 = vrot.lane.b32.xlu0 %v388, 16
        %v408 = vpop.permute.xlu0 %407
        %409 = vrot.lane.b32.xlu0 %v389, 16
        %v410 = vpop.permute.xlu0 %409
        %411 = vrot.lane.b32.xlu0 %v390, 16
        %v412 = vpop.permute.xlu0 %411
        %413 = vrot.lane.b32.xlu0 %v391, 16
        %v414 = vpop.permute.xlu0 %413
        %415 = vrot.lane.b32.xlu0 %v392, 16
        %v416 = vpop.permute.xlu0 %415
        %vm425 = vcmask 130048
        %v426 = vsel %vm425, %v377, %v402
        %v427 = vsel %vm425, %v378, %v404
        %v428 = vsel %vm425, %v379, %v406
        %v429 = vsel %vm425, %v380, %v408
        %v430 = vsel %vm425, %v381, %v410
        %v431 = vsel %vm425, %v382, %v412
        %v432 = vsel %vm425, %v383, %v414
        %v433 = vsel %vm425, %v384, %v416
        %vm434 = vcmask 261120
        %435 = vst.msk [vmem:[%s366] sm:$0xff] %vm434, %v426
        %436 = vst.msk [vmem:[%s366 + $0x8] sm:$0xff] %vm434, %v427
        %437 = vst.msk [vmem:[%s366 + $0x20] sm:$0xff] %vm434, %v428
        %438 = vst.msk [vmem:[%s366 + $0x28] sm:$0xff] %vm434, %v429
        %439 = vst.msk [vmem:[%s366 + $0x40] sm:$0xff] %vm434, %v430
        %440 = vst.msk [vmem:[%s366 + $0x48] sm:$0xff] %vm434, %v431
        %441 = vst.msk [vmem:[%s366 + $0x60] sm:$0xff] %vm434, %v432
        %442 = vst.msk [vmem:[%s366 + $0x68] sm:$0xff] %vm434, %v433
        %v443 = vld [vmem:[%s318] sm:$0xff]
        %v444 = vld [vmem:[%s318 + $0x8] sm:$0xff]
        %v445 = vld [vmem:[%s318 + $0x10] sm:$0xff]
        %v446 = vld [vmem:[%s318 + $0x18] sm:$0xff]
        %v447 = vld [vmem:[%s318 + $0x20] sm:$0xff]
        %v448 = vld [vmem:[%s318 + $0x28] sm:$0xff]
        %v449 = vld [vmem:[%s318 + $0x30] sm:$0xff]
        %v450 = vld [vmem:[%s318 + $0x38] sm:$0xff]
        %v451 = vld [vmem:[%s327] sm:$0xff]
        %v452 = vld [vmem:[%s327 + $0x8] sm:$0xff]
        %v453 = vld [vmem:[%s327 + $0x10] sm:$0xff]
        %v454 = vld [vmem:[%s327 + $0x18] sm:$0xff]
        %v455 = vld [vmem:[%s327 + $0x20] sm:$0xff]
        %v456 = vld [vmem:[%s327 + $0x28] sm:$0xff]
        %v457 = vld [vmem:[%s327 + $0x30] sm:$0xff]
        %v458 = vld [vmem:[%s327 + $0x38] sm:$0xff]
        %467 = vrot.lane.b32.xlu0 %v451, 16
        %v468 = vpop.permute.xlu0 %467
        %469 = vrot.lane.b32.xlu0 %v452, 16
        %v470 = vpop.permute.xlu0 %469
        %471 = vrot.lane.b32.xlu0 %v453, 16
        %v472 = vpop.permute.xlu0 %471
        %473 = vrot.lane.b32.xlu0 %v454, 16
        %v474 = vpop.permute.xlu0 %473
        %475 = vrot.lane.b32.xlu0 %v455, 16
        %v476 = vpop.permute.xlu0 %475
        %477 = vrot.lane.b32.xlu0 %v456, 16
        %v478 = vpop.permute.xlu0 %477
        %479 = vrot.lane.b32.xlu0 %v457, 16
        %v480 = vpop.permute.xlu0 %479
        %481 = vrot.lane.b32.xlu0 %v458, 16
        %v482 = vpop.permute.xlu0 %481
        %v491 = vsel %vm425, %v443, %v468
        %v492 = vsel %vm425, %v444, %v470
        %v493 = vsel %vm425, %v445, %v472
        %v494 = vsel %vm425, %v446, %v474
        %v495 = vsel %vm425, %v447, %v476
        %v496 = vsel %vm425, %v448, %v478
        %v497 = vsel %vm425, %v449, %v480
        %v498 = vsel %vm425, %v450, %v482
        %s499 = scalar_lea.vmem %s366, 16 [#allocation10]
        %500 = vst.msk [vmem:[%s499] sm:$0xff] %vm434, %v491
        %501 = vst.msk [vmem:[%s499 + $0x8] sm:$0xff] %vm434, %v492
        %502 = vst.msk [vmem:[%s499 + $0x20] sm:$0xff] %vm434, %v493
        %503 = vst.msk [vmem:[%s499 + $0x28] sm:$0xff] %vm434, %v494
        %504 = vst.msk [vmem:[%s499 + $0x40] sm:$0xff] %vm434, %v495
        %505 = vst.msk [vmem:[%s499 + $0x48] sm:$0xff] %vm434, %v496
        %506 = vst.msk [vmem:[%s499 + $0x60] sm:$0xff] %vm434, %v497
        %507 = vst.msk [vmem:[%s499 + $0x68] sm:$0xff] %vm434, %v498
        %s508 = sand.u32 %s161, 1
        %s509 = scalar_lea.sflag [#allocation4], %s508
        %s510 = sand.u32 %s161, 1
        %s511 = smul.addr %s510, 128
        %s512 = scalar_lea.vmem [#allocation10], %s511
        // Predicated region
        $region53: #{merge_four_images.1} parent=35 // pred_check
          %p513 = pneg %p171
        $region54: #{merge_four_images.1} parent=35 // pred_check_branch
          %515 = sbr.rel (%p513) target = $region56
        $region55: #{merge_four_images.1} parent=35 // pred_region
          %s516 = smul.u32 4, %s31
          %s517 = smul.u32 2, %s32
          %s519 = ssub.s32 2048, 2048
          %520 = vsyncadd %s509, %s519
          %s521 = smul.addr %s516, 4
          %s522 = sadd.s32 %s517, %s521
          %s523 = smul.addr %s522, 128
          %s524 = scalar_lea.hbm %s4, %s523
          %s525 = sshll.u32 %s512, 4
          %s526 = int_to_ptr.vmem [resolvable:$true] %s525
          %531 = dma.vmem_to_hbm [thread:$0]  %s526, 2048, %s524, %s509, 128, 128, 8
        $region56: #{merge_four_images.1} parent=35 // pred_fallthru
          _
      $region36: #{merge_four_images.1} parent=5 // pred_fallthru
        _
      %p532 = scmp.le.s32.totalorder 2, %s22
      // Predicated region
      $region57: #{merge_four_images.1} parent=5 // pred_check
        %p533 = pneg %p532
      $region58: #{merge_four_images.1} parent=5 // pred_check_branch
        %535 = sbr.rel (%p533) target = $region60
      $region59: #{merge_four_images.1} parent=5 // pred_region
        %s536 = ssub.s32 %s22, 2
        // Predicated region
        $region61: #{merge_four_images.1} parent=59 // pred_check
          %p537 = pneg %p177
        $region62: #{merge_four_images.1} parent=59 // pred_check_branch
          %539 = sbr.rel (%p537) target = $region64
        $region63: #{merge_four_images.1} parent=59 // pred_region
          %s540 = sand.u32 %s162, 1
          %s541 = scalar_lea.sflag [#allocation4], %s540
          %s542 = sand.u32 %s162, 1
          %s543 = smul.addr %s542, 128
          %s544 = scalar_lea.vmem [#allocation10], %s543
          %545 = dma.done %s541, 2048
        $region64: #{merge_four_images.1} parent=59 // pred_fallthru
          _
      $region60: #{merge_four_images.1} parent=5 // pred_fallthru
        _
    $region6: #{merge_four_images.1} parent=1 // loop_footer
      %s26 = sadd.s32 1, %s22
    $region7: #{merge_four_images.1} parent=1 // loop_footer_branch
      %21 = sbr.rel target = $region3
    $region8: #{merge_four_images.1} parent=1 // loop_exit
      _
    %546 = vsyncpa [#allocation3], 1
    %s547 = scalar_lea.sflag [#allocation3], 1
    %548 = vsyncpa %s547, 1
    %549 = vsyncpa [#allocation6], 1
    %s550 = scalar_lea.sflag [#allocation6], 1
    %551 = vsyncpa %s550, 1
    %552 = vsyncpa [#allocation9], 1
    %s553 = scalar_lea.sflag [#allocation9], 1
    %554 = vsyncpa %s553, 1
    %555 = vsyncpa [#allocation4], 1
    %s556 = scalar_lea.sflag [#allocation4], 1
    %557 = vsyncpa %s556, 1

</llo_original>
